<compile_context>
chip_gen: v7x
topology: tpu7x:2x2x1
jax: 0.10.0
libtpu: 0.0.40
codegen_flags: <defaults>
</compile_context>

<pallas_src>
import functools

import jax
import jax.numpy as jnp
from jax.experimental import pallas as pl
from jax.experimental.pallas import tpu as pltpu


def baseline3_kernel(x_ref, p_ref, o_ref):
    # x: (B, D) fp32
    # p: (D+4, W) fp32 packed as [w1^T (D rows); gamma; beta; w2; b2-row]
    #    where b2 lives at p[D+3, 0].
    D = x_ref.shape[1]

    x = x_ref[...]
    w1t = p_ref[0:D, :]              # (D, W)
    gamma = p_ref[D:D + 1, :]        # (1, W)
    beta = p_ref[D + 1:D + 2, :]     # (1, W)
    w2 = p_ref[D + 2:D + 3, :]       # (1, W)
    b2 = p_ref[D + 3:D + 4, 0:1]     # (1, 1)

    # First linear (bias-free: b1 cancels exactly under batch-statistics BN).
    h = jnp.dot(x, w1t, preferred_element_type=jnp.float32)   # (B, W) on MXU

    # BatchNorm1d, training-mode batch stats, biased variance, eps=1e-5.
    # Single pass: two independent axis-0 reductions (sum, sum of squares).
    inv_b = 1.0 / h.shape[0]
    s1 = jnp.sum(h, axis=0, keepdims=True)
    s2 = jnp.sum(h * h, axis=0, keepdims=True)
    mean = s1 * inv_b
    var = jnp.maximum(s2 * inv_b - mean * mean, 0.0)   # clamp vs. cancellation

    # Fold BN affine into a single scale/shift: 2 VPU ops per element.
    scale = gamma * jax.lax.rsqrt(var + 1e-5)
    shift = beta - mean * scale

    # ReLU
    a = jnp.maximum(h * scale + shift, 0.0)

    # Second linear (W -> 1) as VPU multiply + lane reduction; + b2.
    logits = jnp.sum(a * w2, axis=-1, keepdims=True) + b2      # (B, 1)

    # Sigmoid
    o_ref[...] = jax.nn.sigmoid(logits)


def pack_params(w1, b1, gamma, beta, w2, b2):
    """One-time host-side packing of all weights into a single (D+4, W) array.

    b1 is accepted for interface parity but intentionally NOT packed: under
    batch-statistics BatchNorm the first linear's bias cancels exactly.
    """
    del b1
    W, D = w1.shape
    b2_row = jnp.zeros((1, W), jnp.float32).at[0, 0].set(
        jnp.asarray(b2, jnp.float32).reshape(()))
    packed = jnp.concatenate(
        [w1.T.astype(jnp.float32),            # rows 0..D-1 : w1^T (D, W)
         gamma.reshape(1, W),                 # row D       : gamma
         beta.reshape(1, W),                  # row D+1     : beta
         w2.reshape(1, W),                    # row D+2     : w2
         b2_row],                             # row D+3     : [b2, 0, ...]
        axis=0).astype(jnp.float32)           # (D+4, W)
    return packed


@functools.partial(jax.jit, static_argnames=())
def baseline3_forward(x, packed):
    B, D = x.shape
    W = packed.shape[1]
    assert packed.shape == (D + 4, W)

    vmem = pl.BlockSpec(memory_space=pltpu.MemorySpace.VMEM)
    return pl.pallas_call(
        baseline3_kernel,
        out_shape=jax.ShapeDtypeStruct((B, 1), jnp.float32),
        in_specs=[vmem, vmem],
        out_specs=vmem,
    )(x, packed)


def reference_forward(x, w1, b1, gamma, beta, w2, b2):
    h = x @ w1.T + b1
    mean = jnp.mean(h, axis=0, keepdims=True)
    var = jnp.mean((h - mean) ** 2, axis=0, keepdims=True)
    h = (h - mean) / jnp.sqrt(var + 1e-5) * gamma + beta
    a = jnp.maximum(h, 0.0)
    return jax.nn.sigmoid(a @ w2.T + b2)


if __name__ == "__main__":
    batch = 8
    embedding_dim = 32
    shallom_width = embedding_dim * 2  # 64

    key = jax.random.PRNGKey(0)
    k_x, k_w1, k_b1, k_w2, k_b2 = jax.random.split(key, 5)

    # Deterministic parameter init (uniform, roughly PyTorch-Linear-like scale).
    bound1 = 1.0 / (embedding_dim ** 0.5)
    bound2 = 1.0 / (shallom_width ** 0.5)
    w1 = jax.random.uniform(k_w1, (shallom_width, embedding_dim),
                            jnp.float32, -bound1, bound1)
    b1 = jax.random.uniform(k_b1, (1, shallom_width),
                            jnp.float32, -bound1, bound1)
    gamma = jnp.ones((1, shallom_width), jnp.float32)   # BatchNorm1d weight
    beta = jnp.zeros((1, shallom_width), jnp.float32)   # BatchNorm1d bias
    w2 = jax.random.uniform(k_w2, (1, shallom_width),
                            jnp.float32, -bound2, bound2)
    b2 = jax.random.uniform(k_b2, (1, 1), jnp.float32, -bound2, bound2)

    # Input s of shape (batch, embedding_dim); torch.cat([s], 1) is identity.
    x = jax.random.normal(k_x, (batch, embedding_dim), jnp.float32)

    # One-time weight packing (constant across calls), then a jitted forward.
    packed = jax.block_until_ready(pack_params(w1, b1, gamma, beta, w2, b2))

    out = baseline3_forward(x, packed)
    out = jax.block_until_ready(out)

    ref = reference_forward(x, w1, b1, gamma, beta, w2, b2)
    assert out.shape == (batch, 1)
    assert jnp.allclose(out, ref, atol=1e-5, rtol=1e-5)

    print("KERNEL_OK")
</pallas_src>

<mosaic_0001>
module attributes {stable_mosaic.version = 11 : i64} {
  func.func @baseline3_kernel(%arg0: memref<8x32xf32, #tpu.memory_space<vmem>>, %arg1: memref<36x64xf32, #tpu.memory_space<vmem>>, %arg2: memref<8x1xf32, #tpu.memory_space<vmem>>) attributes {dimension_semantics = [], scalar_prefetch = 0 : i64, scratch_operands = 0 : i64, tpu.core_type = #tpu.core_type<tc>} {
    %c0 = arith.constant 0 : index
    %c0_0 = arith.constant 0 : index
    %0 = vector.load %arg0[%c0, %c0_0] : memref<8x32xf32, #tpu.memory_space<vmem>>, vector<8x32xf32>
    %c0_1 = arith.constant 0 : index
    %c0_2 = arith.constant 0 : index
    %1 = vector.load %arg1[%c0_1, %c0_2] : memref<36x64xf32, #tpu.memory_space<vmem>>, vector<32x64xf32>
    %c32 = arith.constant 32 : index
    %c0_3 = arith.constant 0 : index
    %2 = vector.load %arg1[%c32, %c0_3] : memref<36x64xf32, #tpu.memory_space<vmem>>, vector<1x64xf32>
    %c33 = arith.constant 33 : index
    %c0_4 = arith.constant 0 : index
    %3 = vector.load %arg1[%c33, %c0_4] : memref<36x64xf32, #tpu.memory_space<vmem>>, vector<1x64xf32>
    %c34 = arith.constant 34 : index
    %c0_5 = arith.constant 0 : index
    %4 = vector.load %arg1[%c34, %c0_5] : memref<36x64xf32, #tpu.memory_space<vmem>>, vector<1x64xf32>
    %c35 = arith.constant 35 : index
    %c0_6 = arith.constant 0 : index
    %5 = vector.load %arg1[%c35, %c0_6] : memref<36x64xf32, #tpu.memory_space<vmem>>, vector<1x1xf32>
    %cst = arith.constant dense<0.000000e+00> : vector<8x64xf32>
    %6 = tpu.matmul %0, %1, %cst {dimension_numbers = #tpu.dot_dimension_numbers<[1], [0], [0], [1], [0, 0, 1, 1], [], []>} : vector<8x32xf32>, vector<32x64xf32>, vector<8x64xf32> -> vector<8x64xf32>
    %cst_7 = arith.constant dense<0.000000e+00> : vector<64xf32>
    %7 = vector.multi_reduction <add>, %6, %cst_7 [0] : vector<8x64xf32> to vector<64xf32>
    %8 = vector.shape_cast %7 : vector<64xf32> to vector<1x64xf32>
    %9 = arith.mulf %6, %6 : vector<8x64xf32>
    %cst_8 = arith.constant dense<0.000000e+00> : vector<64xf32>
    %10 = vector.multi_reduction <add>, %9, %cst_8 [0] : vector<8x64xf32> to vector<64xf32>
    %11 = vector.shape_cast %10 : vector<64xf32> to vector<1x64xf32>
    %cst_9 = arith.constant 1.250000e-01 : f32
    %12 = vector.broadcast %cst_9 : f32 to vector<1x64xf32>
    %13 = arith.mulf %8, %12 : vector<1x64xf32>
    %cst_10 = arith.constant 1.250000e-01 : f32
    %14 = vector.broadcast %cst_10 : f32 to vector<1x64xf32>
    %15 = arith.mulf %11, %14 : vector<1x64xf32>
    %16 = arith.mulf %13, %13 : vector<1x64xf32>
    %17 = arith.subf %15, %16 : vector<1x64xf32>
    %cst_11 = arith.constant 0.000000e+00 : f32
    %18 = vector.broadcast %cst_11 : f32 to vector<1x64xf32>
    %19 = arith.maximumf %17, %18 : vector<1x64xf32>
    %cst_12 = arith.constant 9.99999974E-6 : f32
    %20 = vector.broadcast %cst_12 : f32 to vector<1x64xf32>
    %21 = arith.addf %19, %20 : vector<1x64xf32>
    %22 = math.rsqrt %21 : vector<1x64xf32>
    %23 = arith.mulf %2, %22 : vector<1x64xf32>
    %24 = arith.mulf %13, %23 : vector<1x64xf32>
    %25 = arith.subf %3, %24 : vector<1x64xf32>
    %26 = vector.broadcast %23 : vector<1x64xf32> to vector<8x64xf32>
    %27 = arith.mulf %6, %26 : vector<8x64xf32>
    %28 = vector.broadcast %25 : vector<1x64xf32> to vector<8x64xf32>
    %29 = arith.addf %27, %28 : vector<8x64xf32>
    %cst_13 = arith.constant 0.000000e+00 : f32
    %30 = vector.broadcast %cst_13 : f32 to vector<8x64xf32>
    %31 = arith.maximumf %29, %30 : vector<8x64xf32>
    %32 = vector.broadcast %4 : vector<1x64xf32> to vector<8x64xf32>
    %33 = arith.mulf %31, %32 : vector<8x64xf32>
    %cst_14 = arith.constant dense<0.000000e+00> : vector<8xf32>
    %34 = vector.multi_reduction <add>, %33, %cst_14 [1] : vector<8x64xf32> to vector<8xf32>
    %35 = vector.shape_cast %34 : vector<8xf32> to vector<8x1xf32>
    %36 = vector.broadcast %5 : vector<1x1xf32> to vector<8x1xf32>
    %37 = arith.addf %35, %36 : vector<8x1xf32>
    %38 = arith.negf %37 : vector<8x1xf32>
    %39 = math.exp %38 : vector<8x1xf32>
    %cst_15 = arith.constant 1.000000e+00 : f32
    %40 = vector.broadcast %cst_15 : f32 to vector<8x1xf32>
    %41 = arith.addf %40, %39 : vector<8x1xf32>
    %42 = arith.divf %40, %41 : vector<8x1xf32>
    %c0_16 = arith.constant 0 : index
    %c0_17 = arith.constant 0 : index
    %43 = vector.load %arg2[%c0_16, %c0_17] : memref<8x1xf32, #tpu.memory_space<vmem>>, vector<8x1xf32>
    tpu.vector_store %arg2[%c0_16, %c0_17], %42 {strides = array<i32>} : memref<8x1xf32, #tpu.memory_space<vmem>>, vector<8x1xf32>,
    return
  }
}

</mosaic_0001>

<llo_original>
// kernel: baseline3_forward.1
$region0: #{baseline3_forward.1}
  #allocation0 [shape = 'u32[]', space=smem, size = 0x4, offset = 0x4, fixed_abs, tag = 'smem constant byte address 0x4 - core index']
  #allocation1 [shape = 'u32[144,128]{1,0:T(1,128)}', space=vmem, size = 0x12000, scoped, tag = 'internal scratch']
  %s0 = inlined_call_operand.hbm [shape: f32[8,32], index: 0, kind: input, shape index: {}]
  %s1 = inlined_call_operand.hbm [shape: f32[36,64], index: 1, kind: input, shape index: {}]
  %s2 = inlined_call_operand.vmem [shape: f32[8,1], index: 2, kind: output, shape index: {}]
  %s3 = sld [smem:[#allocation0]]
  $region26: #{baseline3_forward.1} parent=0
    _
  %s5 = ssub.s32 1, %s3
  %s6 = scalar_select 0, %s5, %s3
  $region1: #{baseline3_forward.1} parent=0
    #allocation2 [shape = 'u8[4096]{0}', space=vmem, size = 0x1000, scoped, tag = 'input window, operand 0, single buffered']
    #allocation3 [shape = 's32[1]{0}', space=sflag, size = 0x4, scoped, tag = 'scoped memory for baseline3_forward.1']
    #allocation4 [shape = 'u8[20480]{0}', space=vmem, size = 0x5000, scoped, tag = 'input window, operand 1, single buffered']
    #allocation5 [shape = 's32[1]{0}', space=sflag, size = 0x4, scoped, tag = 'scoped memory for baseline3_forward.1']
    %7 = vsyncpa [#allocation3], 0
    %8 = vsyncpa [#allocation5], 0
    // Predicated region
    $region2: #{baseline3_forward.1} parent=1 // pred_check
      _
    $region3: #{baseline3_forward.1} parent=1 // pred_check_branch
      %10 = sbr.rel (0) target = $region5
    $region4: #{baseline3_forward.1} parent=1 // pred_region
      %s12 = ssub.s32 128, 128
      %13 = vsyncadd [#allocation3], %s12
      %s15 = sshll.u32 [#allocation2], 4
      %s16 = int_to_ptr.vmem [resolvable:$true] %s15
      %18 = dma.hbm_to_vmem [thread:$0]  %s0, 128, %s16, [#allocation3]
    $region5: #{baseline3_forward.1} parent=1 // pred_fallthru
      _
    // Predicated region
    $region6: #{baseline3_forward.1} parent=1 // pred_check
      _
    $region7: #{baseline3_forward.1} parent=1 // pred_check_branch
      %20 = sbr.rel (0) target = $region9
    $region8: #{baseline3_forward.1} parent=1 // pred_region
      %s22 = ssub.s32 640, 640
      %23 = vsyncadd [#allocation5], %s22
      %s24 = sshll.u32 [#allocation4], 4
      %s25 = int_to_ptr.vmem [resolvable:$true] %s24
      %30 = dma.hbm_to_vmem [thread:$0]  %s1, 640, %s25, [#allocation5], 128, 128, 8
    $region9: #{baseline3_forward.1} parent=1 // pred_fallthru
      _
    // Predicated region
    $region10: #{baseline3_forward.1} parent=1 // pred_check
      _
    $region11: #{baseline3_forward.1} parent=1 // pred_check_branch
      %32 = sbr.rel (0) target = $region13
    $region12: #{baseline3_forward.1} parent=1 // pred_region
      %33 = dma.done [#allocation3], 128
    $region13: #{baseline3_forward.1} parent=1 // pred_fallthru
      _
    // Predicated region
    $region14: #{baseline3_forward.1} parent=1 // pred_check
      _
    $region15: #{baseline3_forward.1} parent=1 // pred_check_branch
      %35 = sbr.rel (0) target = $region17
    $region16: #{baseline3_forward.1} parent=1 // pred_region
      %36 = dma.done [#allocation5], 640
    $region17: #{baseline3_forward.1} parent=1 // pred_fallthru
      _
    %v37 = vld [vmem:[#allocation2] sm:$0xff]
    %v38 = vld [vmem:[#allocation4] sm:$0xff]
    %v39 = vld [vmem:[#allocation4 + $0x8] sm:$0xff]
    %v40 = vld [vmem:[#allocation4 + $0x10] sm:$0xff]
    %v41 = vld [vmem:[#allocation4 + $0x18] sm:$0xff]
    %v42 = vld [vmem:[#allocation4 + $0x20] sm:$0x1]
    %v43 = vld [vmem:[#allocation4 + $0x21] sm:$0x1]
    %v44 = vld [vmem:[#allocation4 + $0x22] sm:$0x1]
    %v45 = vld [vmem:[#allocation4 + $0x23] sm:$0x1]
    %vm46 = vcmask 261120
    %v48 = vsel %vm46, %v37, 0
    %50 = vmatprep.subr.mxu0 0.0
    %51 = vmatpush1.msra.mxu0 %v38
    %52 = vmatprep.subr.mxu0 0.0
    %53 = vmatpush1.msra.mxu0 %v39
    %54 = vmatprep.subr.mxu0 0.0
    %55 = vmatpush1.msra.mxu0 %v40
    %56 = vmatprep.subr.mxu0 0.0
    %57 = vmatpush1.msra.mxu0 %v41
    %58 = vmatprep.subr.mxu0 0.0
    %59 = vmatpush1.msra.mxu0 0.0
    %60 = vmatprep.subr.mxu0 0.0
    %61 = vmatpush1.msra.mxu0 0.0
    %62 = vmatprep.subr.mxu0 0.0
    %63 = vmatpush1.msra.mxu0 0.0
    %64 = vmatprep.subr.mxu0 0.0
    %65 = vmatpush1.msra.mxu0 0.0
    %66 = vmatprep.subr.mxu0 0.0
    %67 = vmatpush1.msra.mxu0 0.0
    %68 = vmatprep.subr.mxu0 0.0
    %69 = vmatpush1.msra.mxu0 0.0
    %70 = vmatprep.subr.mxu0 0.0
    %71 = vmatpush1.msra.mxu0 0.0
    %72 = vmatprep.subr.mxu0 0.0
    %73 = vmatpush1.msra.mxu0 0.0
    %74 = vmatprep.subr.mxu0 0.0
    %75 = vmatpush1.msra.mxu0 0.0
    %76 = vmatprep.subr.mxu0 0.0
    %77 = vmatpush1.msra.mxu0 0.0
    %78 = vmatprep.subr.mxu0 0.0
    %79 = vmatpush1.msra.mxu0 0.0
    %80 = vmatprep.subr.mxu0 0.0
    %81 = vmatpush1.msra.mxu0 0.0
    %82 = vmatprep.subr.mxu0 0.0
    %83 = vmatpush1.msra.mxu0 0.0
    %84 = vmatprep.subr.mxu0 0.0
    %85 = vmatpush1.msra.mxu0 0.0
    %86 = vmatprep.subr.mxu0 0.0
    %87 = vmatpush1.msra.mxu0 0.0
    %88 = vmatprep.subr.mxu0 0.0
    %89 = vmatpush1.msra.mxu0 0.0
    %90 = vmatprep.subr.mxu0 0.0
    %91 = vmatpush1.msra.mxu0 0.0
    %92 = vmatprep.subr.mxu0 0.0
    %93 = vmatpush1.msra.mxu0 0.0
    %94 = vmatprep.subr.mxu0 0.0
    %95 = vmatpush1.msra.mxu0 0.0
    %96 = vmatprep.subr.mxu0 0.0
    %97 = vmatpush1.msra.mxu0 0.0
    %98 = vmatprep.subr.mxu0 0.0
    %99 = vmatpush1.msra.mxu0 0.0
    %100 = vmatprep.subr.mxu0 0.0
    %101 = vmatpush1.msra.mxu0 0.0
    %102 = vmatprep.subr.mxu0 0.0
    %103 = vmatpush1.msra.mxu0 0.0
    %104 = vmatprep.subr.mxu0 0.0
    %105 = vmatpush1.msra.mxu0 0.0
    %106 = vmatprep.subr.mxu0 0.0
    %107 = vmatpush1.msra.mxu0 0.0
    %108 = vmatprep.subr.mxu0 0.0
    %109 = vmatpush1.msra.mxu0 0.0
    %110 = vmatprep.subr.mxu0 0.0
    %111 = vmatpush1.msra.mxu0 0.0
    %112 = vmatprep.subr.mxu0 0.0
    %113 = vmatpush1.msra.mxu0 0.0
    %114 = vmatprep.mubr.f32.mxu0 0.0
    %115 = vmatmul.mubr.f32.gmra.mrb[0].mxu0 %v48
    %v116 = vpop.f32.mrb[0].mxu0
    %v117 = vadd.f32 0.0, %v116
    %v118 = vpop.f32.mrb[0].mxu0
    %119 = vdwg.mxu0
    %vm120 = vcmask 523264
    %v121 = vsel %vm120, %v117, 0.0
    %v122 = vrot.slane %v121, 4
    %v123 = vadd.f32 %v121, %v122
    %v124 = vrot.slane %v123, 2
    %v125 = vadd.f32 %v123, %v124
    %v126 = vrot.slane %v125, 1
    %v127 = vadd.f32 %v125, %v126
    %v128 = vmul.f32 %v117, %v117
    %v129 = vsel %vm120, %v128, 0.0
    %v130 = vrot.slane %v129, 4
    %v131 = vadd.f32 %v129, %v130
    %v132 = vrot.slane %v131, 2
    %v133 = vadd.f32 %v131, %v132
    %v134 = vrot.slane %v133, 1
    %v135 = vadd.f32 %v133, %v134
    %v136 = vmul.f32 %v127, 0.125
    %v137 = vmul.f32 %v135, 0.125
    %v138 = vmul.f32 %v136, %v136
    %v139 = vsub.f32 %v137, %v138
    %v140 = vmax.f32 %v139, 0.0
    %v141 = vadd.f32 %v140, 1e-05
    %v142 = vrsqrt.pop %v141
    %v143 = vmul.f32 %v42, %v142
    %v144 = vmul.f32 %v136, %v143
    %v145 = vsub.f32 %v43, %v144
    %v146 = vlaneseq
    %v147 = vshrl.u32 %v146, 7
    %v148 = vsub.s32 0, %v147
    %v149 = vrot.slane %v143, %v148
    %v150 = vmul.f32 %v117, %v149
    %v151 = vlaneseq
    %v152 = vshrl.u32 %v151, 7
    %v153 = vsub.s32 0, %v152
    %v154 = vrot.slane %v145, %v153
    %v155 = vadd.f32 %v150, %v154
    %v156 = vmax.f32 %v155, 0.0
    %v157 = vlaneseq
    %v158 = vshrl.u32 %v157, 7
    %v159 = vsub.s32 0, %v158
    %v160 = vrot.slane %v44, %v159
    %v161 = vmul.f32 %v156, %v160
    %v162 = vsel %vm120, %v161, 0.0
    %163 = vadd.xlane.f32.xlu0 %v162
    %v164 = vpop.xlane.xlu0 %163
    %v165 = vlaneseq
    %v166 = vshrl.u32 %v165, 7
    %v167 = vsub.s32 0, %v166
    %v168 = vrot.slane %v45, %v167
    %v169 = vadd.f32 %v164, %v168
    %v170 = vxor.u32 %v169, 2147483648
    %v171 = vmul.f32 %v170, 1.442695
    %v172 = vpow.pop %v171
    %v173 = vadd.f32 %v172, 1.0
    %v174 = vrcp.pop %v173
    %v175 = vmul.f32 1.0, %v174
    %vm176 = vcmask 7168
    %177 = vst.msk [vmem:[%s2] sm:$0xff] %vm176, %v175
    // Predicated region
    $region18: #{baseline3_forward.1} parent=1 // pred_check
      _
    $region19: #{baseline3_forward.1} parent=1 // pred_check_branch
      %179 = sbr.rel (0) target = $region21
    $region20: #{baseline3_forward.1} parent=1 // pred_region
      _
    $region21: #{baseline3_forward.1} parent=1 // pred_fallthru
      _
    // Predicated region
    $region22: #{baseline3_forward.1} parent=1 // pred_check
      _
    $region23: #{baseline3_forward.1} parent=1 // pred_check_branch
      %181 = sbr.rel (0) target = $region25
    $region24: #{baseline3_forward.1} parent=1 // pred_region
      _
    $region25: #{baseline3_forward.1} parent=1 // pred_fallthru
      _
    %182 = vsyncpa [#allocation3], 1
    %183 = vsyncpa [#allocation5], 1

</llo_original>
